<compile_context>
chip_gen: v6e
topology: v6e:2x2x1
jax: 0.10.0
libtpu: 0.0.40
codegen_flags: <defaults>
</compile_context>

<pallas_src>
import math
import functools

import jax
import jax.numpy as jnp
from jax.experimental import pallas as pl
from jax.experimental.pallas import tpu as pltpu


def _round_up(x, m):
    return ((x + m - 1) // m) * m


def _vmem_capacity_bytes():
    """Physical VMEM per TensorCore; conservative (v7x, 64 MiB) fallback."""
    try:
        return int(pltpu.get_tpu_info().vmem_capacity_bytes)
    except Exception:
        return 64 << 20


def _choose_tq(Lq, Lk, D_p, q_isz, kv_isz, ctx_isz, attn_isz, return_attn, budget):
    """Largest q-tile (multiple of 8, capped at 256, floored at 128) whose
    working set -- pipelined I/O buffers PLUS the in-kernel f32 score/exp/attn
    intermediates -- fits the per-chip VMEM budget."""
    lq8 = _round_up(max(Lq, 1), 8)

    def working_set(tq):
        kv = 2 * 2 * Lk * D_p * kv_isz               # K + V, double-buffered
        qi = 2 * tq * D_p * q_isz                    # q tile, double-buffered
        co = 2 * tq * D_p * ctx_isz                  # context tile, double-buffered
        ao = 2 * tq * Lk * attn_isz if return_attn else 0
        live = 3 * tq * Lk * 4 + 2 * tq * D_p * 4    # f32 score/exp/attn + ctx acc
        return kv + qi + co + ao + live + (2 << 20)  # + Mosaic internal scratch

    tq = min(256, lq8)
    floor = min(128, tq)   # review: never shrink the MXU row count below 128
    while tq > floor and working_set(tq) > budget:
        tq = max(floor, _round_up(tq // 2, 8))
    return tq, working_set(tq)


def _sdpa_kernel(q_ref, k_ref, v_ref, ctx_ref, *maybe_attn_ref,
                 inv_scale, return_attn):
    # q_ref: (TQ, D_p); k_ref/v_ref: (Lk, D_p); batch dim squeezed.
    attn_ref = maybe_attn_ref[0] if return_attn else None

    q = q_ref[...]
    if inv_scale != 1.0:
        # Only taken on the no-cast path; on the bf16 path the wrapper folded
        # the 1/sqrt(d) scale into the (already required) cast pass over q.
        q = q * jnp.asarray(inv_scale, q.dtype)

    # score = q @ k^T expressed as 'qd,kd->qk' (contract last dims directly,
    # no explicit k.T relayout); bf16/f32 operands, f32 accumulation.
    score = jax.lax.dot_general(
        q, k_ref[...],
        dimension_numbers=(((1,), (1,)), ((), ())),
        preferred_element_type=jnp.float32,
    )

    # TODO(synk): optional boolean `mask` (masked_fill_ with -1e9) and the
    # `block_mask`/gamma branch of the PyTorch module are not wired in; the
    # default-constructed module (mask=None, block_mask=None) is implemented.

    # Numerically stable softmax over keys. Exact (non-approx) normalization
    # so attention rows sum to 1 like torch.softmax -- the approx EUP
    # reciprocal previously broke the 1e-3 correctness check.
    m = jnp.max(score, axis=-1, keepdims=True)
    e = jnp.exp(score - m)
    denom = jnp.sum(e, axis=-1, keepdims=True)
    attn = e * pl.reciprocal(denom, approx=False)    # (TQ, 1) reciprocal, exact

    if return_attn:
        attn_ref[...] = attn.astype(attn_ref.dtype)

    v = v_ref[...]
    ctx = jax.lax.dot_general(
        attn.astype(v.dtype), v,
        dimension_numbers=(((1,), (0,)), ((), ())),
        preferred_element_type=jnp.float32,
    )
    ctx_ref[...] = ctx.astype(ctx_ref.dtype)


def scaled_dot_product_attention(query, key, value, *, scale=True,
                                 mxu_dtype="auto", attn_dtype=None,
                                 return_attn=True):
    """Pallas implementation of ScaledDotProductAttention.forward
    (mask=None, block_mask=None).

    mxu_dtype: dtype for the MXU operands. "auto" (default) casts f32 inputs
        to bfloat16 once in the wrapper (bf16 MXU is native on v5e/v6e/v7x);
        softmax math stays in f32. Pass None to keep the input dtype.
    attn_dtype: dtype of the returned attention weights (default: query dtype,
        matching PyTorch); pass jnp.bfloat16 to halve the dominant writeback.
    return_attn: if False, skip the (B, Lq, Lk) attention writeback entirely.
    """
    B, Lq, D = query.shape
    _, Lk, _ = key.shape
    assert key.shape == (B, Lk, D) and value.shape == (B, Lk, D)

    inv_scale = (1.0 / math.sqrt(D)) if scale else 1.0

    if mxu_dtype == "auto":
        mxu_dtype = jnp.bfloat16 if query.dtype == jnp.float32 else None
    out_dtype = query.dtype
    if attn_dtype is None:
        attn_dtype = query.dtype

    # Lane-dense model dim for the MXU operands / context output. Lk is NOT
    # padded: full-array-dim blocks are legal, the attention output keeps its
    # true width (no padded writeback + slice pass), and no key-mask is needed.
    D_p = _round_up(D, 128)

    cast = (mxu_dtype is not None) and (mxu_dtype != query.dtype)
    if cast:
        # Fold 1/sqrt(d) into the cast pass over q (the cast exists anyway, so
        # this is not an extra wrapper-side HBM pass); K/V are DMA'd as bf16.
        q_scaled = query if inv_scale == 1.0 else query * jnp.asarray(inv_scale, query.dtype)
        q_in = q_scaled.astype(mxu_dtype)
        k_in = key.astype(mxu_dtype)
        v_in = value.astype(mxu_dtype)
        kernel_inv_scale = 1.0
    else:
        q_in, k_in, v_in = query, key, value
        kernel_inv_scale = inv_scale

    q_isz = jnp.dtype(q_in.dtype).itemsize
    kv_isz = jnp.dtype(k_in.dtype).itemsize
    ctx_isz = jnp.dtype(out_dtype).itemsize
    attn_isz = jnp.dtype(attn_dtype).itemsize

    vmem_cap = _vmem_capacity_bytes()
    budget = int(vmem_cap * 0.70)
    TQ, working = _choose_tq(Lq, Lk, D_p, q_isz, kv_isz, ctx_isz, attn_isz,
                             return_attn, budget)
    Lq_p = _round_up(Lq, TQ)

    def pad3(x, rows, cols):
        pr, pc = rows - x.shape[1], cols - x.shape[2]
        if pr or pc:
            x = jnp.pad(x, ((0, 0), (0, pr), (0, pc)))
        return x

    q_p = pad3(q_in, Lq_p, D_p)
    k_p = pad3(k_in, Lk, D_p)
    v_p = pad3(v_in, Lk, D_p)

    kernel = functools.partial(
        _sdpa_kernel, inv_scale=kernel_inv_scale, return_attn=return_attn)

    # Grid: batch (outer, megacore-parallel) x q-tiles (inner). K/V index_maps
    # are constant in the inner axis so Pallas keeps them resident between
    # consecutive q-tiles of the same batch.
    grid = (B, Lq_p // TQ)

    ctx_spec = pl.BlockSpec((pl.Squeezed(), TQ, D_p), lambda b, i: (b, i, 0))
    if return_attn:
        out_specs = [ctx_spec,
                     pl.BlockSpec((pl.Squeezed(), TQ, Lk), lambda b, i: (b, i, 0))]
        out_shape = (jax.ShapeDtypeStruct((B, Lq_p, D_p), out_dtype),
                     jax.ShapeDtypeStruct((B, Lq_p, Lk), attn_dtype))
    else:
        out_specs = ctx_spec
        out_shape = jax.ShapeDtypeStruct((B, Lq_p, D_p), out_dtype)

    grid_spec = pltpu.PrefetchScalarGridSpec(
        num_scalar_prefetch=0,
        grid=grid,
        in_specs=[
            pl.BlockSpec((pl.Squeezed(), TQ, D_p), lambda b, i: (b, i, 0)),
            pl.BlockSpec((pl.Squeezed(), Lk, D_p), lambda b, i: (b, 0, 0)),
            pl.BlockSpec((pl.Squeezed(), Lk, D_p), lambda b, i: (b, 0, 0)),
        ],
        out_specs=out_specs,
    )

    # Scoped VMEM: cover the working set with headroom, stay inside the chip's
    # physical VMEM (64 MiB on v7x, 128 MiB on v5e/v6e via get_tpu_info).
    vmem_limit = int(min(vmem_cap - (4 << 20),
                         max(32 << 20, working + (16 << 20))))

    outs = pl.pallas_call(
        kernel,
        grid_spec=grid_spec,
        out_shape=out_shape,
        compiler_params=pltpu.CompilerParams(
            dimension_semantics=("parallel", "arbitrary"),
            vmem_limit_bytes=vmem_limit,
        ),
    )(q_p, k_p, v_p)

    if return_attn:
        ctx_p, attn_p = outs
        attn = attn_p[:, :Lq, :] if Lq_p != Lq else attn_p
    else:
        ctx_p, attn = outs, None

    context = ctx_p[:, :Lq, :D] if (Lq_p != Lq or D_p != D) else ctx_p
    return context, attn


def _reference(query, key, value, *, scale=True, mxu_dtype=None):
    """Pure-JAX reference; when mxu_dtype is given it mirrors the kernel's
    bf16-operand / f32-accumulate matmuls so the comparison is apples-to-apples."""
    inv = (1.0 / math.sqrt(query.shape[-1])) if scale else 1.0
    if mxu_dtype is not None and mxu_dtype != query.dtype:
        q = (query * jnp.asarray(inv, query.dtype)).astype(mxu_dtype)
        k = key.astype(mxu_dtype)
        v = value.astype(mxu_dtype)
        score = jnp.einsum("bqd,bkd->bqk", q, k, preferred_element_type=jnp.float32)
    else:
        v = value
        score = jnp.einsum("bqd,bkd->bqk", query, key,
                           preferred_element_type=jnp.float32) * inv
    attn = jax.nn.softmax(score, axis=-1)
    context = jnp.einsum("bqk,bkd->bqd", attn.astype(v.dtype), v,
                         preferred_element_type=jnp.float32).astype(query.dtype)
    return context, attn.astype(query.dtype)


if __name__ == "__main__":
    B, Lq, Lk, D = 2, 8, 8, 32
    root = jax.random.PRNGKey(0)
    kq, kk, kv = jax.random.split(root, 3)
    query = jax.random.normal(kq, (B, Lq, D), dtype=jnp.float32)
    key_ = jax.random.normal(kk, (B, Lk, D), dtype=jnp.float32)
    value = jax.random.normal(kv, (B, Lq, D), dtype=jnp.float32)

    # Default path (bf16 MXU operands, f32 softmax/accumulation).
    context, attn = scaled_dot_product_attention(query, key_, value)
    jax.block_until_ready((context, attn))
    assert context.shape == (B, Lq, D) and attn.shape == (B, Lq, Lk)

    # 1) tight check against a reference using the same bf16 matmul precision
    ref_ctx_bf, ref_attn_bf = _reference(query, key_, value, mxu_dtype=jnp.bfloat16)
    assert jnp.allclose(context, ref_ctx_bf, atol=5e-3, rtol=5e-3)
    assert jnp.allclose(attn, ref_attn_bf, atol=5e-3, rtol=5e-3)

    # 2) loose sanity check against the pure-f32 reference (catches gross bugs)
    ref_ctx32, ref_attn32 = _reference(query, key_, value, mxu_dtype=None)
    assert jnp.allclose(context, ref_ctx32, atol=5e-2, rtol=5e-2)
    assert jnp.allclose(attn, ref_attn32, atol=5e-2, rtol=5e-2)

    # 3) exact softmax normalization (the previous approx reciprocal broke this)
    row_sums = jnp.sum(attn.astype(jnp.float32), axis=-1)
    assert jnp.allclose(row_sums, jnp.ones_like(row_sums), atol=1e-3)

    # 4) attention-free fast path (skips the (B, Lq, Lk) HBM writeback)
    ctx_only, attn_none = scaled_dot_product_attention(query, key_, value,
                                                       return_attn=False)
    jax.block_until_ready(ctx_only)
    assert attn_none is None
    assert jnp.allclose(ctx_only, ref_ctx_bf, atol=5e-3, rtol=5e-3)

    print("KERNEL_OK")
</pallas_src>

<mosaic_0001>
module attributes {stable_mosaic.version = 11 : i64} {
  func.func @_sdpa_kernel(%arg0: i32, %arg1: i32, %arg2: memref<1x8x128xbf16, #tpu.memory_space<vmem>>, %arg3: memref<1x8x128xbf16, #tpu.memory_space<vmem>>, %arg4: memref<1x8x128xbf16, #tpu.memory_space<vmem>>, %arg5: memref<1x8x128xf32, #tpu.memory_space<vmem>>, %arg6: memref<1x8x8xf32, #tpu.memory_space<vmem>>) attributes {dimension_semantics = [#tpu.dimension_semantics<parallel>, #tpu.dimension_semantics<arbitrary>], iteration_bounds = array<i64: 2, 1>, scalar_prefetch = 0 : i64, scratch_operands = 0 : i64, tpu.core_type = #tpu.core_type<tc>, window_params = [{transform_indices = @transform_0, window_bounds = array<i64: 1, 8, 128>}, {transform_indices = @transform_1, window_bounds = array<i64: 1, 8, 128>}, {transform_indices = @transform_2, window_bounds = array<i64: 1, 8, 128>}, {transform_indices = @transform_3, window_bounds = array<i64: 1, 8, 128>}, {transform_indices = @transform_4, window_bounds = array<i64: 1, 8, 8>}]} {
    %c0 = arith.constant 0 : index
    %c0_0 = arith.constant 0 : index
    %c0_1 = arith.constant 0 : index
    %0 = vector.load %arg2[%c0, %c0_0, %c0_1] : memref<1x8x128xbf16, #tpu.memory_space<vmem>>, vector<1x8x128xbf16>
    %1 = vector.shape_cast %0 : vector<1x8x128xbf16> to vector<8x128xbf16>
    %c0_2 = arith.constant 0 : index
    %c0_3 = arith.constant 0 : index
    %c0_4 = arith.constant 0 : index
    %2 = vector.load %arg3[%c0_2, %c0_3, %c0_4] : memref<1x8x128xbf16, #tpu.memory_space<vmem>>, vector<1x8x128xbf16>
    %3 = vector.shape_cast %2 : vector<1x8x128xbf16> to vector<8x128xbf16>
    %cst = arith.constant dense<0.000000e+00> : vector<8x8xf32>
    %4 = tpu.matmul %1, %3, %cst {dimension_numbers = #tpu.dot_dimension_numbers<[1], [1], [0], [0], [0, 0, 1, 0], [], []>} : vector<8x128xbf16>, vector<8x128xbf16>, vector<8x8xf32> -> vector<8x8xf32>
    %cst_5 = arith.constant dense<0xFF800000> : vector<8xf32>
    %5 = vector.multi_reduction <maximumf>, %4, %cst_5 [1] : vector<8x8xf32> to vector<8xf32>
    %6 = vector.shape_cast %5 : vector<8xf32> to vector<8x1xf32>
    %7 = vector.broadcast %6 : vector<8x1xf32> to vector<8x8xf32>
    %8 = arith.subf %4, %7 : vector<8x8xf32>
    %9 = math.exp %8 : vector<8x8xf32>
    %cst_6 = arith.constant dense<0.000000e+00> : vector<8xf32>
    %10 = vector.multi_reduction <add>, %9, %cst_6 [1] : vector<8x8xf32> to vector<8xf32>
    %11 = vector.shape_cast %10 : vector<8xf32> to vector<8x1xf32>
    %12 = tpu.reciprocal %11 : vector<8x1xf32> -> vector<8x1xf32>
    %13 = vector.broadcast %12 : vector<8x1xf32> to vector<8x8xf32>
    %14 = arith.mulf %9, %13 : vector<8x8xf32>
    %c0_7 = arith.constant 0 : index
    %c0_8 = arith.constant 0 : index
    %c0_9 = arith.constant 0 : index
    %15 = vector.load %arg6[%c0_7, %c0_8, %c0_9] : memref<1x8x8xf32, #tpu.memory_space<vmem>>, vector<1x8x8xf32>
    %16 = vector.shape_cast %15 : vector<1x8x8xf32> to vector<8x8xf32>
    %17 = vector.shape_cast %14 : vector<8x8xf32> to vector<1x8x8xf32>
    tpu.vector_store %arg6[%c0_7, %c0_8, %c0_9], %17 {strides = array<i32>} : memref<1x8x8xf32, #tpu.memory_space<vmem>>, vector<1x8x8xf32>,
    %c0_10 = arith.constant 0 : index
    %c0_11 = arith.constant 0 : index
    %c0_12 = arith.constant 0 : index
    %18 = vector.load %arg4[%c0_10, %c0_11, %c0_12] : memref<1x8x128xbf16, #tpu.memory_space<vmem>>, vector<1x8x128xbf16>
    %19 = vector.shape_cast %18 : vector<1x8x128xbf16> to vector<8x128xbf16>
    %20 = arith.truncf %14 : vector<8x8xf32> to vector<8x8xbf16>
    %cst_13 = arith.constant dense<0.000000e+00> : vector<8x128xf32>
    %21 = tpu.matmul %20, %19, %cst_13 {dimension_numbers = #tpu.dot_dimension_numbers<[1], [0], [0], [1], [0, 0, 1, 1], [], []>} : vector<8x8xbf16>, vector<8x128xbf16>, vector<8x128xf32> -> vector<8x128xf32>
    %c0_14 = arith.constant 0 : index
    %c0_15 = arith.constant 0 : index
    %c0_16 = arith.constant 0 : index
    %22 = vector.load %arg5[%c0_14, %c0_15, %c0_16] : memref<1x8x128xf32, #tpu.memory_space<vmem>>, vector<1x8x128xf32>
    %23 = vector.shape_cast %22 : vector<1x8x128xf32> to vector<8x128xf32>
    %24 = vector.shape_cast %21 : vector<8x128xf32> to vector<1x8x128xf32>
    tpu.vector_store %arg5[%c0_14, %c0_15, %c0_16], %24 {strides = array<i32>} : memref<1x8x128xf32, #tpu.memory_space<vmem>>, vector<1x8x128xf32>,
    return
  }
  func.func @transform_0(%arg0: i32, %arg1: i32) -> (i32, i32, i32) {
    %c0_i32 = arith.constant 0 : i32
    %c0_i32_0 = arith.constant 0 : i32
    return %arg0, %arg1, %c0_i32 : i32, i32, i32
  }
  func.func @transform_1(%arg0: i32, %arg1: i32) -> (i32, i32, i32) {
    %c0_i32 = arith.constant 0 : i32
    %c0_i32_0 = arith.constant 0 : i32
    %c0_i32_1 = arith.constant 0 : i32
    return %arg0, %c0_i32, %c0_i32_0 : i32, i32, i32
  }
  func.func @transform_2(%arg0: i32, %arg1: i32) -> (i32, i32, i32) {
    %c0_i32 = arith.constant 0 : i32
    %c0_i32_0 = arith.constant 0 : i32
    %c0_i32_1 = arith.constant 0 : i32
    return %arg0, %c0_i32, %c0_i32_0 : i32, i32, i32
  }
  func.func @transform_3(%arg0: i32, %arg1: i32) -> (i32, i32, i32) {
    %c0_i32 = arith.constant 0 : i32
    %c0_i32_0 = arith.constant 0 : i32
    return %arg0, %arg1, %c0_i32 : i32, i32, i32
  }
  func.func @transform_4(%arg0: i32, %arg1: i32) -> (i32, i32, i32) {
    %c0_i32 = arith.constant 0 : i32
    %c0_i32_0 = arith.constant 0 : i32
    return %arg0, %arg1, %c0_i32 : i32, i32, i32
  }
}

</mosaic_0001>

<llo_original>
// kernel: tpu_custom_call.1
$region0: #{tpu_custom_call.1}
  #allocation0 [shape = 'u32[]', space=smem, size = 0x4, offset = 0x4, fixed_abs, tag = 'smem constant byte address 0x4 - core index']
  #allocation1 [shape = 'u32[144,128]{1,0:T(1,128)}', space=vmem, size = 0x12000, scoped, tag = 'internal scratch']
  %s0 = inlined_call_operand.hbm [shape: bf16[2,8,128], index: 0, kind: input, shape index: {}]
  %s1 = inlined_call_operand.hbm [shape: bf16[2,8,128], index: 1, kind: input, shape index: {}]
  %s2 = inlined_call_operand.hbm [shape: bf16[2,8,128], index: 2, kind: input, shape index: {}]
  %s3 = inlined_call_operand.hbm [shape: f32[2,8,128], index: 3, kind: output, shape index: {0}]
  %s4 = inlined_call_operand.hbm [shape: f32[2,8,8], index: 4, kind: output, shape index: {1}]
  %5 = xla_tuple %s3, %s4
  %s6 = sld [smem:[#allocation0]]
  $region65: #{tpu_custom_call.1} parent=0
    _
  %s8 = ssub.s32 1, %s6
  %s9 = scalar_select 0, %s8, %s6
  $region1: #{tpu_custom_call.1} parent=0
    #allocation2 [shape = 'u8[4096]{0}', space=vmem, size = 0x1000, scoped, tag = 'input window, operand 0']
    #allocation3 [shape = 's32[2]{0}', space=sflag, size = 0x8, scoped, tag = 'scoped memory for tpu_custom_call.1']
    #allocation4 [shape = 's32[2]{0}', space=sflag, size = 0x8, scoped, tag = 'scoped memory for tpu_custom_call.1']
    #allocation5 [shape = 'u8[4096]{0}', space=vmem, size = 0x1000, scoped, tag = 'input window, operand 1']
    #allocation6 [shape = 's32[2]{0}', space=sflag, size = 0x8, scoped, tag = 'scoped memory for tpu_custom_call.1']
    #allocation7 [shape = 'u8[4096]{0}', space=vmem, size = 0x1000, scoped, tag = 'input window, operand 2']
    #allocation8 [shape = 'u8[8192]{0}', space=vmem, size = 0x2000, scoped, tag = 'output window, operand 0']
    #allocation9 [shape = 'u8[8192]{0}', space=vmem, size = 0x2000, scoped, tag = 'output window, operand 1']
    #allocation10 [shape = 's32[2]{0}', space=sflag, size = 0x8, scoped, tag = 'scoped memory for tpu_custom_call.1']
    %10 = vsyncpa [#allocation3], 0
    %s11 = scalar_lea.sflag [#allocation3], 1
    %12 = vsyncpa %s11, 0
    %13 = vsyncpa [#allocation6], 0
    %s14 = scalar_lea.sflag [#allocation6], 1
    %15 = vsyncpa %s14, 0
    %16 = vsyncpa [#allocation4], 0
    %s17 = scalar_lea.sflag [#allocation4], 1
    %18 = vsyncpa %s17, 0
    %19 = vsyncpa [#allocation10], 0
    %s20 = scalar_lea.sflag [#allocation10], 1
    %21 = vsyncpa %s20, 0
    loop: start=0, step=1, limit=4
    $region2: #{tpu_custom_call.1} parent=1 // loop_pre_header
      _
    $region3: #{tpu_custom_call.1} parent=1 // loop_header
      %s23 = sphi 0, %s27
      %p24 = scmp.ge.s32.totalorder %s23, 4
      %s30 = sphi 0, %s42
      %s31 = sphi 0, %s38
      %s32 = sphi 0, %s30
      %s33 = sphi 0, %s31
      %s34 = sphi 0, %s32
      %s35 = sphi 0, %s33
      %s47 = sphi 0, %s49
      %s50 = sphi 0, %s47
      %s51 = sphi 0, %s50
      %s67 = sphi 0, %s51
      %s73 = sphi 0, %s75
      %s76 = sphi 0, %s73
      %s77 = sphi 0, %s76
      %s93 = sphi 0, %s77
      %s99 = sphi 0, %s101
      %s102 = sphi 0, %s99
      %s103 = sphi 0, %s102
      %s119 = sphi 0, %s103
      %s127 = sphi 0, %s129
      %s130 = sphi 0, %s127
      %s131 = sphi 0, %s130
      %s147 = sphi 0, %s131
      %s155 = sphi 0, %s157
      %s158 = sphi 0, %s155
      %s159 = sphi 0, %s158
      %s175 = sphi 0, %s159
    $region4: #{tpu_custom_call.1} parent=1 // loop_header_branch
      %26 = sbr.rel (%p24) target = $region8
    $region5: #{tpu_custom_call.1} parent=1 // loop_body
      %s28 = ssub.s32 %s23, 1
      %s29 = ssub.s32 %s23, 2
      %s36 = sadd.s32 1, %s31
      %p37 = scmp.ge.s32.totalorder %s36, 1
      %s38 = scalar_select %p37, 0, %s36
      %s39 = sadd.s32 1, %s30
      %s40 = scalar_select %p37, %s39, %s30
      %p41 = scmp.ge.s32.totalorder %s40, 2
      %s42 = scalar_select %p41, 0, %s40
      %s43 = ssub.s32 %s30, %s42
      %s44 = ssub.s32 %s31, %s38
      %s45 = sor.u32 %s43, %s44
      %p46 = scmp.eq.s32.totalorder %s45, 0
      %s48 = sadd.s32 %s47, 1
      %s49 = scalar_select %p46, %s47, %s48
      %p52 = pneg %p46
      %p53 = scmp.eq.s32.totalorder %s23, 1
      %p54 = por %p52, %p53
      %p55 = scmp.ne.s32.totalorder %s47, %s50
      %p56 = scmp.eq.s32.totalorder %s23, 0
      %p57 = por %p55, %p56
      %p58 = scmp.ne.s32.totalorder %s47, %s50
      %p59 = scmp.eq.s32.totalorder %s28, 1
      %p60 = por %p58, %p59
      %p61 = scmp.ne.s32.totalorder %s50, %s51
      %p62 = scmp.eq.s32.totalorder %s28, 0
      %p63 = por %p61, %p62
      %p64 = scmp.ne.s32.totalorder %s50, %s51
      %p65 = scmp.eq.s32.totalorder %s29, 1
      %p66 = por %p64, %p65
      %p68 = scmp.ne.s32.totalorder %s51, %s67
      %p69 = scmp.eq.s32.totalorder %s29, 0
      %p70 = por %p68, %p69
      %s71 = ssub.s32 %s30, %s42
      %p72 = scmp.eq.s32.totalorder %s71, 0
      %s74 = sadd.s32 %s73, 1
      %s75 = scalar_select %p72, %s73, %s74
      %p78 = pneg %p72
      %p79 = scmp.eq.s32.totalorder %s23, 1
      %p80 = por %p78, %p79
      %p81 = scmp.ne.s32.totalorder %s73, %s76
      %p82 = scmp.eq.s32.totalorder %s23, 0
      %p83 = por %p81, %p82
      %p84 = scmp.ne.s32.totalorder %s73, %s76
      %p85 = scmp.eq.s32.totalorder %s28, 1
      %p86 = por %p84, %p85
      %p87 = scmp.ne.s32.totalorder %s76, %s77
      %p88 = scmp.eq.s32.totalorder %s28, 0
      %p89 = por %p87, %p88
      %p90 = scmp.ne.s32.totalorder %s76, %s77
      %p91 = scmp.eq.s32.totalorder %s29, 1
      %p92 = por %p90, %p91
      %p94 = scmp.ne.s32.totalorder %s77, %s93
      %p95 = scmp.eq.s32.totalorder %s29, 0
      %p96 = por %p94, %p95
      %s97 = ssub.s32 %s30, %s42
      %p98 = scmp.eq.s32.totalorder %s97, 0
      %s100 = sadd.s32 %s99, 1
      %s101 = scalar_select %p98, %s99, %s100
      %p104 = pneg %p98
      %p105 = scmp.eq.s32.totalorder %s23, 1
      %p106 = por %p104, %p105
      %p107 = scmp.ne.s32.totalorder %s99, %s102
      %p108 = scmp.eq.s32.totalorder %s23, 0
      %p109 = por %p107, %p108
      %p110 = scmp.ne.s32.totalorder %s99, %s102
      %p111 = scmp.eq.s32.totalorder %s28, 1
      %p112 = por %p110, %p111
      %p113 = scmp.ne.s32.totalorder %s102, %s103
      %p114 = scmp.eq.s32.totalorder %s28, 0
      %p115 = por %p113, %p114
      %p116 = scmp.ne.s32.totalorder %s102, %s103
      %p117 = scmp.eq.s32.totalorder %s29, 1
      %p118 = por %p116, %p117
      %p120 = scmp.ne.s32.totalorder %s103, %s119
      %p121 = scmp.eq.s32.totalorder %s29, 0
      %p122 = por %p120, %p121
      %s123 = ssub.s32 %s30, %s42
      %s124 = ssub.s32 %s31, %s38
      %s125 = sor.u32 %s123, %s124
      %p126 = scmp.eq.s32.totalorder %s125, 0
      %s128 = sadd.s32 %s127, 1
      %s129 = scalar_select %p126, %s127, %s128
      %p132 = pneg %p126
      %p133 = scmp.eq.s32.totalorder %s23, 1
      %p134 = por %p132, %p133
      %p135 = scmp.ne.s32.totalorder %s127, %s130
      %p136 = scmp.eq.s32.totalorder %s23, 0
      %p137 = por %p135, %p136
      %p138 = scmp.ne.s32.totalorder %s127, %s130
      %p139 = scmp.eq.s32.totalorder %s28, 1
      %p140 = por %p138, %p139
      %p141 = scmp.ne.s32.totalorder %s130, %s131
      %p142 = scmp.eq.s32.totalorder %s28, 0
      %p143 = por %p141, %p142
      %p144 = scmp.ne.s32.totalorder %s130, %s131
      %p145 = scmp.eq.s32.totalorder %s29, 1
      %p146 = por %p144, %p145
      %p148 = scmp.ne.s32.totalorder %s131, %s147
      %p149 = scmp.eq.s32.totalorder %s29, 0
      %p150 = por %p148, %p149
      %s151 = ssub.s32 %s30, %s42
      %s152 = ssub.s32 %s31, %s38
      %s153 = sor.u32 %s151, %s152
      %p154 = scmp.eq.s32.totalorder %s153, 0
      %s156 = sadd.s32 %s155, 1
      %s157 = scalar_select %p154, %s155, %s156
      %p160 = pneg %p154
      %p161 = scmp.eq.s32.totalorder %s23, 1
      %p162 = por %p160, %p161
      %p163 = scmp.ne.s32.totalorder %s155, %s158
      %p164 = scmp.eq.s32.totalorder %s23, 0
      %p165 = por %p163, %p164
      %p166 = scmp.ne.s32.totalorder %s155, %s158
      %p167 = scmp.eq.s32.totalorder %s28, 1
      %p168 = por %p166, %p167
      %p169 = scmp.ne.s32.totalorder %s158, %s159
      %p170 = scmp.eq.s32.totalorder %s28, 0
      %p171 = por %p169, %p170
      %p172 = scmp.ne.s32.totalorder %s158, %s159
      %p173 = scmp.eq.s32.totalorder %s29, 1
      %p174 = por %p172, %p173
      %p176 = scmp.ne.s32.totalorder %s159, %s175
      %p177 = scmp.eq.s32.totalorder %s29, 0
      %p178 = por %p176, %p177
      %p179 = scmp.le.s32.totalorder 1, %s23
      %p180 = scmp.lt.s32.totalorder %s23, 3
      %p181 = pnand %p179, %p180
      %p182 = pneg %p181
      // Predicated region
      $region9: #{tpu_custom_call.1} parent=5 // pred_check
        _
      $region10: #{tpu_custom_call.1} parent=5 // pred_check_branch
        %184 = sbr.rel (%p181) target = $region12
      $region11: #{tpu_custom_call.1} parent=5 // pred_region
        %s185 = ssub.s32 %s23, 1
      $region12: #{tpu_custom_call.1} parent=5 // pred_fallthru
        _
      %p186 = scmp.lt.s32.totalorder %s23, 2
      // Predicated region
      $region13: #{tpu_custom_call.1} parent=5 // pred_check
        %p187 = pneg %p186
      $region14: #{tpu_custom_call.1} parent=5 // pred_check_branch
        %189 = sbr.rel (%p187) target = $region16
      $region15: #{tpu_custom_call.1} parent=5 // pred_region
        // Predicated region
        $region17: #{tpu_custom_call.1} parent=15 // pred_check
          %p190 = pneg %p57
        $region18: #{tpu_custom_call.1} parent=15 // pred_check_branch
          %192 = sbr.rel (%p190) target = $region20
        $region19: #{tpu_custom_call.1} parent=15 // pred_region
          %s193 = sand.u32 %s47, 1
          %s194 = scalar_lea.sflag [#allocation3], %s193
          %s195 = sand.u32 %s47, 1
          %s196 = smul.addr %s195, 4
          %s197 = scalar_lea.vmem [#allocation2], %s196
          %s199 = ssub.s32 64, 64
          %200 = vsyncadd %s194, %s199
          %s201 = sadd.s32 %s31, %s30
          %s202 = smul.addr %s201, 64
          %s203 = scalar_lea.hbm %s0, %s202
          %s205 = sshll.u32 %s197, 4
          %s206 = int_to_ptr.vmem [resolvable:$true] %s205
          %208 = dma.hbm_to_vmem [thread:$0]  %s203, 64, %s206, %s194
        $region20: #{tpu_custom_call.1} parent=15 // pred_fallthru
          _
        // Predicated region
        $region21: #{tpu_custom_call.1} parent=15 // pred_check
          %p209 = pneg %p83
        $region22: #{tpu_custom_call.1} parent=15 // pred_check_branch
          %211 = sbr.rel (%p209) target = $region24
        $region23: #{tpu_custom_call.1} parent=15 // pred_region
          %s212 = sand.u32 %s23, 1
          %s213 = scalar_lea.sflag [#allocation6], %s212
          %s214 = sand.u32 %s73, 1
          %s215 = smul.addr %s214, 4
          %s216 = scalar_lea.vmem [#allocation5], %s215
          %s218 = ssub.s32 64, 64
          %219 = vsyncadd %s213, %s218
          %s220 = smul.addr %s30, 64
          %s221 = scalar_lea.hbm %s1, %s220
          %s223 = sshll.u32 %s216, 4
          %s224 = int_to_ptr.vmem [resolvable:$true] %s223
          %226 = dma.hbm_to_vmem [thread:$0]  %s221, 64, %s224, %s213
        $region24: #{tpu_custom_call.1} parent=15 // pred_fallthru
          _
        // Predicated region
        $region25: #{tpu_custom_call.1} parent=15 // pred_check
          %p227 = pneg %p109
        $region26: #{tpu_custom_call.1} parent=15 // pred_check_branch
          %229 = sbr.rel (%p227) target = $region28
        $region27: #{tpu_custom_call.1} parent=15 // pred_region
          %s230 = sand.u32 %s23, 1
          %s231 = scalar_lea.sflag [#allocation6], %s230
          %s232 = sand.u32 %s99, 1
          %s233 = smul.addr %s232, 4
          %s234 = scalar_lea.vmem [#allocation7], %s233
          %s236 = ssub.s32 64, 64
          %237 = vsyncadd %s231, %s236
          %s238 = smul.addr %s30, 64
          %s239 = scalar_lea.hbm %s2, %s238
          %s241 = sshll.u32 %s234, 4
          %s242 = int_to_ptr.vmem [resolvable:$true] %s241
          %244 = dma.hbm_to_vmem [thread:$0]  %s239, 64, %s242, %s231
        $region28: #{tpu_custom_call.1} parent=15 // pred_fallthru
          _
      $region16: #{tpu_custom_call.1} parent=5 // pred_fallthru
        _
      %p245 = scmp.le.s32.totalorder 1, %s23
      %p246 = scmp.lt.s32.totalorder %s23, 3
      %p247 = pnand %p245, %p246
      %p248 = pneg %p247
      // Predicated region
      $region29: #{tpu_custom_call.1} parent=5 // pred_check
        _
      $region30: #{tpu_custom_call.1} parent=5 // pred_check_branch
        %250 = sbr.rel (%p247) target = $region32
      $region31: #{tpu_custom_call.1} parent=5 // pred_region
        %s251 = ssub.s32 %s23, 1
        %s252 = sand.u32 %s50, 1
        %s253 = scalar_lea.sflag [#allocation3], %s252
        %s254 = sand.u32 %s50, 1
        %s255 = smul.addr %s254, 4
        %s256 = scalar_lea.vmem [#allocation2], %s255
        // Predicated region
        $region33: #{tpu_custom_call.1} parent=31 // pred_check
          %p257 = pneg %p63
        $region34: #{tpu_custom_call.1} parent=31 // pred_check_branch
          %259 = sbr.rel (%p257) target = $region36
        $region35: #{tpu_custom_call.1} parent=31 // pred_region
          %260 = dma.done %s253, 64
        $region36: #{tpu_custom_call.1} parent=31 // pred_fallthru
          _
        %s261 = sand.u32 %s28, 1
        %s262 = scalar_lea.sflag [#allocation6], %s261
        %s263 = sand.u32 %s76, 1
        %s264 = smul.addr %s263, 4
        %s265 = scalar_lea.vmem [#allocation5], %s264
        // Predicated region
        $region37: #{tpu_custom_call.1} parent=31 // pred_check
          %p266 = pneg %p89
        $region38: #{tpu_custom_call.1} parent=31 // pred_check_branch
          %268 = sbr.rel (%p266) target = $region40
        $region39: #{tpu_custom_call.1} parent=31 // pred_region
          %269 = dma.done %s262, 64
        $region40: #{tpu_custom_call.1} parent=31 // pred_fallthru
          _
        %s270 = sand.u32 %s28, 1
        %s271 = scalar_lea.sflag [#allocation6], %s270
        %s272 = sand.u32 %s102, 1
        %s273 = smul.addr %s272, 4
        %s274 = scalar_lea.vmem [#allocation7], %s273
        // Predicated region
        $region41: #{tpu_custom_call.1} parent=31 // pred_check
          %p275 = pneg %p115
        $region42: #{tpu_custom_call.1} parent=31 // pred_check_branch
          %277 = sbr.rel (%p275) target = $region44
        $region43: #{tpu_custom_call.1} parent=31 // pred_region
          %278 = dma.done %s271, 64
        $region44: #{tpu_custom_call.1} parent=31 // pred_fallthru
          _
        %s279 = sand.u32 %s50, 1
        %s280 = scalar_lea.sflag [#allocation3], %s279
        %s281 = sand.u32 %s50, 1
        %s282 = smul.addr %s281, 4
        %s283 = scalar_lea.vmem [#allocation2], %s282
        %p284 = pneg %p63
        %p285 = pneg %p60
        %s286 = sand.u32 %s28, 1
        %s287 = scalar_lea.sflag [#allocation6], %s286
        %s288 = sand.u32 %s76, 1
        %s289 = smul.addr %s288, 4
        %s290 = scalar_lea.vmem [#allocation5], %s289
        %p291 = pneg %p89
        %p292 = pneg %p86
        %s293 = sand.u32 %s28, 1
        %s294 = scalar_lea.sflag [#allocation6], %s293
        %s295 = sand.u32 %s102, 1
        %s296 = smul.addr %s295, 4
        %s297 = scalar_lea.vmem [#allocation7], %s296
        %p298 = pneg %p115
        %p299 = pneg %p112
        %p300 = pneg %p143
        %p301 = pneg %p140
        %s302 = sand.u32 %s130, 1
        %s303 = scalar_lea.sflag [#allocation4], %s302
        %s304 = sand.u32 %s130, 1
        %s305 = smul.addr %s304, 8
        %s306 = scalar_lea.vmem [#allocation8], %s305
        %p307 = pneg %p171
        %p308 = pneg %p168
        %s309 = sand.u32 %s158, 1
        %s310 = scalar_lea.sflag [#allocation10], %s309
        %s311 = sand.u32 %s158, 1
        %s312 = smul.addr %s311, 8
        %s313 = scalar_lea.vmem [#allocation9], %s312
        %v315 = vld [vmem:[%s256] sm:$0xf]
        %v316 = vld [vmem:[%s265] sm:$0xf]
        %317 = vmatprep.subr.bf16.mxu0 0
        %318 = vmatpush1.bf16.xpose.msra.mxu0 0
        %319 = vmatprep.subr.bf16.mxu0 0
        %320 = vmatpush1.bf16.xpose.msra.mxu0 0
        %321 = vmatprep.subr.bf16.mxu0 0
        %322 = vmatpush1.bf16.xpose.msra.mxu0 0
        %323 = vmatprep.subr.bf16.mxu0 0
        %324 = vmatpush1.bf16.xpose.msra.mxu0 0
        %325 = vmatprep.subr.bf16.mxu0 0
        %326 = vmatpush1.bf16.xpose.msra.mxu0 0
        %327 = vmatprep.subr.bf16.mxu0 0
        %328 = vmatpush1.bf16.xpose.msra.mxu0 0
        %329 = vmatprep.subr.bf16.mxu0 0
        %330 = vmatpush1.bf16.xpose.msra.mxu0 0
        %331 = vmatprep.subr.bf16.mxu0 0
        %332 = vmatpush1.bf16.xpose.msra.mxu0 %v316
        %333 = vmatprep.subr.bf16.mxu0 0
        %334 = vmatpush2.bf16.xpose.msra.mxu0 0
        %335 = vmatprep.subr.bf16.mxu0 0
        %336 = vmatpush2.bf16.xpose.msra.mxu0 0
        %337 = vmatprep.subr.bf16.mxu0 0
        %338 = vmatpush2.bf16.xpose.msra.mxu0 0
        %339 = vmatprep.subr.bf16.mxu0 0
        %340 = vmatpush2.bf16.xpose.msra.mxu0 0
        %341 = vmatprep.subr.bf16.mxu0 0
        %342 = vmatpush2.bf16.xpose.msra.mxu0 0
        %343 = vmatprep.subr.bf16.mxu0 0
        %344 = vmatpush2.bf16.xpose.msra.mxu0 0
        %345 = vmatprep.subr.bf16.mxu0 0
        %346 = vmatpush2.bf16.xpose.msra.mxu0 0
        %347 = vmatprep.subr.bf16.mxu0 0
        %348 = vmatpush2.bf16.xpose.msra.mxu0 0
        %349 = vmatprep.mubr.bf16.mxu0 0
        %350 = vmatmul.mubr.bf16.gmra.mxu0 %v315
        %v351 = vpop.f32.mrf.mxu0
        %v352 = vadd.f32 0.0, %v351
        %v353 = vpop.f32.mrf.mxu0
        %v354 = vpop.f32.mrf.mxu0
        %v355 = vpop.f32.mrf.mxu0
        %356 = vdwg.mxu0
        %vm357 = vcmask 64512
        %v358 = vsel %vm357, %v352, -inf
        %359 = vmax.xlane.f32.xlu0 %v358
        %v360 = vpop.xlane.xlu0 %359
        %v361 = vsub.f32 %v352, %v360
        %v362 = vmul.f32 %v361, 1.442695
        %v363 = vpow.pop %v362
        %v364 = vsel %vm357, %v363, 0.0
        %365 = vadd.xlane.f32.xlu0 %v364
        %v366 = vpop.xlane.xlu0 %365
        %v367 = vrcp.pop %v366
        %v368 = vmul.f32 %v363, %v367
        %369 = vst.msk [vmem:[%s313] sm:$0xff] %vm357, %v368
        %v370 = vld [vmem:[%s274] sm:$0xf]
        %v371 = vpack.c.bf16 %v368, %v368
        %v373 = vsel %vm357, %v371, 0
        %vm375 = vcmask 1043456
        %v377 = vsel %vm375, %v370, 0
        %379 = vmatprep.subr.bf16.mxu0 0
        %380 = vmatpush1.bf16.msra.mxu0 0
        %381 = vmatprep.subr.bf16.mxu0 0
        %382 = vmatpush1.bf16.msra.mxu0 0
        %383 = vmatprep.subr.bf16.mxu0 0
        %384 = vmatpush1.bf16.msra.mxu0 0
        %385 = vmatprep.subr.bf16.mxu0 0
        %386 = vmatpush1.bf16.msra.mxu0 0
        %387 = vmatprep.subr.bf16.mxu0 0
        %388 = vmatpush1.bf16.msra.mxu0 0
        %389 = vmatprep.subr.bf16.mxu0 0
        %390 = vmatpush1.bf16.msra.mxu0 0
        %391 = vmatprep.subr.bf16.mxu0 0
        %392 = vmatpush1.bf16.msra.mxu0 0
        %393 = vmatprep.subr.bf16.mxu0 0
        %394 = vmatpush1.bf16.msra.mxu0 %v377
        %395 = vmatprep.subr.bf16.mxu0 0
        %396 = vmatpush2.bf16.msra.mxu0 0
        %397 = vmatprep.subr.bf16.mxu0 0
        %398 = vmatpush2.bf16.msra.mxu0 0
        %399 = vmatprep.subr.bf16.mxu0 0
        %400 = vmatpush2.bf16.msra.mxu0 0
        %401 = vmatprep.subr.bf16.mxu0 0
        %402 = vmatpush2.bf16.msra.mxu0 0
        %403 = vmatprep.subr.bf16.mxu0 0
        %404 = vmatpush2.bf16.msra.mxu0 0
        %405 = vmatprep.subr.bf16.mxu0 0
        %406 = vmatpush2.bf16.msra.mxu0 0
        %407 = vmatprep.subr.bf16.mxu0 0
        %408 = vmatpush2.bf16.msra.mxu0 0
        %409 = vmatprep.subr.bf16.mxu0 0
        %410 = vmatpush2.bf16.msra.mxu0 0
        %411 = vmatprep.mubr.bf16.mxu0 0
        %412 = vmatmul.mubr.bf16.gmra.mxu0 %v373
        %v413 = vpop.f32.mrf.mxu0
        %v414 = vadd.f32 0.0, %v413
        %v415 = vpop.f32.mrf.mxu0
        %v416 = vpop.f32.mrf.mxu0
        %v417 = vpop.f32.mrf.mxu0
        %418 = vdwg.mxu0
        %419 = vst [vmem:[%s306] sm:$0xff] %v414
        %s420 = sand.u32 %s130, 1
        %s421 = scalar_lea.sflag [#allocation4], %s420
        %s422 = sand.u32 %s130, 1
        %s423 = smul.addr %s422, 8
        %s424 = scalar_lea.vmem [#allocation8], %s423
        %s425 = sand.u32 %s158, 1
        %s426 = scalar_lea.sflag [#allocation10], %s425
        %s427 = sand.u32 %s158, 1
        %s428 = smul.addr %s427, 8
        %s429 = scalar_lea.vmem [#allocation9], %s428
        // Predicated region
        $region45: #{tpu_custom_call.1} parent=31 // pred_check
          %p430 = pneg %p140
        $region46: #{tpu_custom_call.1} parent=31 // pred_check_branch
          %432 = sbr.rel (%p430) target = $region48
        $region47: #{tpu_custom_call.1} parent=31 // pred_region
          %s434 = ssub.s32 128, 128
          %435 = vsyncadd %s421, %s434
          %s436 = sadd.s32 %s33, %s32
          %s437 = smul.addr %s436, 128
          %s438 = scalar_lea.hbm %s3, %s437
          %s440 = sshll.u32 %s424, 4
          %s441 = int_to_ptr.vmem [resolvable:$true] %s440
          %443 = dma.vmem_to_hbm [thread:$0]  %s441, 128, %s438, %s421
        $region48: #{tpu_custom_call.1} parent=31 // pred_fallthru
          _
        // Predicated region
        $region49: #{tpu_custom_call.1} parent=31 // pred_check
          %p444 = pneg %p168
        $region50: #{tpu_custom_call.1} parent=31 // pred_check_branch
          %446 = sbr.rel (%p444) target = $region52
        $region51: #{tpu_custom_call.1} parent=31 // pred_region
          %s448 = ssub.s32 128, 128
          %449 = vsyncadd %s426, %s448
          %s450 = sadd.s32 %s33, %s32
          %s451 = smul.addr %s450, 128
          %s452 = scalar_lea.hbm %s4, %s451
          %s454 = sshll.u32 %s429, 4
          %s455 = int_to_ptr.vmem [resolvable:$true] %s454
          %457 = dma.vmem_to_hbm [thread:$0]  %s455, 128, %s452, %s426
        $region52: #{tpu_custom_call.1} parent=31 // pred_fallthru
          _
      $region32: #{tpu_custom_call.1} parent=5 // pred_fallthru
        _
      %p458 = scmp.le.s32.totalorder 2, %s23
      // Predicated region
      $region53: #{tpu_custom_call.1} parent=5 // pred_check
        %p459 = pneg %p458
      $region54: #{tpu_custom_call.1} parent=5 // pred_check_branch
        %461 = sbr.rel (%p459) target = $region56
      $region55: #{tpu_custom_call.1} parent=5 // pred_region
        %s462 = ssub.s32 %s23, 2
        // Predicated region
        $region57: #{tpu_custom_call.1} parent=55 // pred_check
          %p463 = pneg %p146
        $region58: #{tpu_custom_call.1} parent=55 // pred_check_branch
          %465 = sbr.rel (%p463) target = $region60
        $region59: #{tpu_custom_call.1} parent=55 // pred_region
          %s466 = sand.u32 %s131, 1
          %s467 = scalar_lea.sflag [#allocation4], %s466
          %s468 = sand.u32 %s131, 1
          %s469 = smul.addr %s468, 8
          %s470 = scalar_lea.vmem [#allocation8], %s469
          %471 = dma.done %s467, 128
        $region60: #{tpu_custom_call.1} parent=55 // pred_fallthru
          _
        // Predicated region
        $region61: #{tpu_custom_call.1} parent=55 // pred_check
          %p472 = pneg %p174
        $region62: #{tpu_custom_call.1} parent=55 // pred_check_branch
          %474 = sbr.rel (%p472) target = $region64
        $region63: #{tpu_custom_call.1} parent=55 // pred_region
          %s475 = sand.u32 %s159, 1
          %s476 = scalar_lea.sflag [#allocation10], %s475
          %s477 = sand.u32 %s159, 1
          %s478 = smul.addr %s477, 8
          %s479 = scalar_lea.vmem [#allocation9], %s478
          %480 = dma.done %s476, 128
        $region64: #{tpu_custom_call.1} parent=55 // pred_fallthru
          _
      $region56: #{tpu_custom_call.1} parent=5 // pred_fallthru
        _
    $region6: #{tpu_custom_call.1} parent=1 // loop_footer
      %s27 = sadd.s32 1, %s23
    $region7: #{tpu_custom_call.1} parent=1 // loop_footer_branch
      %22 = sbr.rel target = $region3
    $region8: #{tpu_custom_call.1} parent=1 // loop_exit
      _
    %481 = vsyncpa [#allocation3], 1
    %s482 = scalar_lea.sflag [#allocation3], 1
    %483 = vsyncpa %s482, 1
    %484 = vsyncpa [#allocation6], 1
    %s485 = scalar_lea.sflag [#allocation6], 1
    %486 = vsyncpa %s485, 1
    %487 = vsyncpa [#allocation4], 1
    %s488 = scalar_lea.sflag [#allocation4], 1
    %489 = vsyncpa %s488, 1
    %490 = vsyncpa [#allocation10], 1
    %s491 = scalar_lea.sflag [#allocation10], 1
    %492 = vsyncpa %s491, 1

</llo_original>
